<compile_context>
chip_gen: v7x
topology: tpu7x:2x2x1
jax: 0.10.0
libtpu: 0.0.40
codegen_flags: <defaults>
</compile_context>

<pallas_src>
import jax
import jax.numpy as jnp
from jax.experimental import pallas as pl
from jax.experimental.pallas import tpu as pltpu

_LANE = 128
_VMEM_LIMIT_BYTES = 48 << 20   # < 64 MiB physical on v7x; raises v5e's 16 MiB default


def _ref_elementwise(x):
    """Plain-JAX PenalizedTanH (tiny inputs / ragged tails)."""
    t = jnp.tanh(x)
    return jnp.where(x > 0, t, 0.25 * t)


def _penalized_tanh_kernel(x_ref, o_ref):
    x = x_ref[...]
    t = jnp.tanh(x)                               # EUP slot
    o_ref[...] = jnp.where(x > 0, t, 0.25 * t)    # VPU slot (plenty of slack)


def _target_block_bytes() -> int:
    # v7x streams ~3.2 TB/s, so per-grid-step overhead is pricier -> bigger
    # blocks there; identify it by its smaller (64 MiB) per-core VMEM.
    try:
        vmem_cap = pltpu.get_tpu_info().vmem_capacity_bytes
    except Exception:
        vmem_cap = 128 << 20
    return (6 << 20) if vmem_cap <= (64 << 20) else (4 << 20)


def _choose_tile_r(R: int, C: int, itemsize: int, sub: int) -> int:
    block_bytes = _target_block_bytes()
    max_tile_r = max(sub, (block_bytes // (C * itemsize)) // sub * sub)
    tile_r = min(max_tile_r, R)
    # Pipelining / megacore granularity: >= 8 grid steps (>= 4 per TC on v7x)
    # when R permits; even step count for balanced 2-TC sharding on small grids.
    desired_steps = min(8, max(1, R // sub))
    if desired_steps > 1 and desired_steps % 2:
        desired_steps -= 1
    if desired_steps > 1:
        cap = max(sub, (R // desired_steps) // sub * sub)
        tile_r = min(tile_r, cap)
    return tile_r


def _run_pallas_2d(x2: jax.Array, tile_r: int) -> jax.Array:
    R, C = x2.shape
    itemsize = jnp.dtype(x2.dtype).itemsize
    n = R * C
    return pl.pallas_call(
        _penalized_tanh_kernel,
        out_shape=jax.ShapeDtypeStruct((R, C), x2.dtype),
        grid_spec=pl.GridSpec(
            grid=(pl.cdiv(R, tile_r),),
            in_specs=[pl.BlockSpec((tile_r, C), lambda i: (i, 0))],
            out_specs=pl.BlockSpec((tile_r, C), lambda i: (i, 0)),
        ),
        compiler_params=pltpu.CompilerParams(
            # NOTE: if an xprof trace on v7x shows one idle TensorCore, switch
            # to explicit core sharding (pltpu.CORE_PARALLEL / pl.core_map).
            dimension_semantics=("parallel",),
            vmem_limit_bytes=_VMEM_LIMIT_BYTES,
        ),
        cost_estimate=pl.CostEstimate(
            flops=2 * n, transcendentals=n, bytes_accessed=2 * n * itemsize),
    )(x2)


def penalized_tanh(x: jax.Array) -> jax.Array:
    """Applies PenalizedTanH elementwise. Accepts any shape / float dtype."""
    orig_shape = x.shape
    n = x.size
    if n == 0:
        return x

    itemsize = jnp.dtype(x.dtype).itemsize
    # Sublane packing multiple: 8 for f32, 16 for bf16, 32 for 8-bit dtypes.
    sub = 8 * max(1, 4 // itemsize)

    # Tiny inputs: a kernel launch + repack isn't worth it.
    if n < _LANE * sub:
        return _ref_elementwise(x)

    flat = x.reshape(-1)

    # 1) Preferred path: a lane-dense width C that divides n exactly, so the
    #    reshape is free and there are no pad/slice HBM passes at all.
    C = None
    for cand in (2048, 1024, 512, 256, 128):
        if n % cand == 0 and n // cand >= sub:
            C = cand
            break

    if C is not None:
        R = n // C
        tile_r = _choose_tile_r(R, C, itemsize, sub)
        out2 = _run_pallas_2d(flat.reshape(R, C), tile_r)
        return out2.reshape(orig_shape)

    # 2) Ragged size: kernel on the aligned bulk, plain jnp on the (< C*sub)
    #    tail, then stitch.  Avoids full-array pad + unpad passes.
    C = _LANE
    for cand in (2048, 1024, 512, 256):
        if n >= cand * sub:
            C = cand
            break
    n_bulk = (n // C) * C
    R = n_bulk // C
    tile_r = _choose_tile_r(R, C, itemsize, sub)
    bulk_out = _run_pallas_2d(flat[:n_bulk].reshape(R, C), tile_r).reshape(-1)
    tail_out = _ref_elementwise(flat[n_bulk:])
    return jnp.concatenate([bulk_out, tail_out]).reshape(orig_shape)


if __name__ == "__main__":
    key = jax.random.PRNGKey(0)

    # NCHW input, matching the PyTorch module's typical use.
    x = jax.random.normal(key, (2, 4, 16, 16), dtype=jnp.float32)
    y = penalized_tanh(x)
    jax.block_until_ready(y)
    ref = jnp.where(x > 0, jnp.tanh(x), 0.25 * jnp.tanh(x))
    assert y.shape == x.shape and y.dtype == x.dtype
    assert jnp.allclose(y, ref, atol=1e-6, rtol=1e-6)

    # Ragged 1-D input: exercises the bulk-kernel + jnp-tail path (no pad).
    x1 = jax.random.normal(key, (3000,), dtype=jnp.float32)
    y1 = penalized_tanh(x1)
    jax.block_until_ready(y1)
    ref1 = jnp.where(x1 > 0, jnp.tanh(x1), 0.25 * jnp.tanh(x1))
    assert y1.shape == x1.shape
    assert jnp.allclose(y1, ref1, atol=1e-6, rtol=1e-6)

    # Medium input: exercises the multi-step grid (pipelined / TC-sharded).
    x2 = jax.random.normal(key, (8, 4, 64, 64), dtype=jnp.float32)
    y2 = penalized_tanh(x2)
    jax.block_until_ready(y2)
    ref2 = jnp.where(x2 > 0, jnp.tanh(x2), 0.25 * jnp.tanh(x2))
    assert y2.shape == x2.shape
    assert jnp.allclose(y2, ref2, atol=1e-6, rtol=1e-6)

    print("KERNEL_OK")
</pallas_src>

<mosaic_0001>
module attributes {stable_mosaic.version = 11 : i64} {
  func.func @_penalized_tanh_kernel(%arg0: i32, %arg1: memref<8x256xf32, #tpu.memory_space<vmem>>, %arg2: memref<8x256xf32, #tpu.memory_space<vmem>>) attributes {dimension_semantics = [#tpu.dimension_semantics<parallel>], iteration_bounds = array<i64: 1>, scalar_prefetch = 0 : i64, scratch_operands = 0 : i64, tpu.core_type = #tpu.core_type<tc>, window_params = [{transform_indices = @transform_0, window_bounds = array<i64: 8, 256>}, {transform_indices = @transform_1, window_bounds = array<i64: 8, 256>}]} {
    %c0 = arith.constant 0 : index
    %c0_0 = arith.constant 0 : index
    %0 = vector.load %arg1[%c0, %c0_0] : memref<8x256xf32, #tpu.memory_space<vmem>>, vector<8x256xf32>
    %1 = math.tanh %0 : vector<8x256xf32>
    %cst = arith.constant 0.000000e+00 : f32
    %2 = vector.broadcast %cst : f32 to vector<8x256xf32>
    %3 = arith.cmpf ogt, %0, %2 : vector<8x256xf32>
    %cst_1 = arith.constant 2.500000e-01 : f32
    %4 = vector.broadcast %cst_1 : f32 to vector<8x256xf32>
    %5 = arith.mulf %4, %1 : vector<8x256xf32>
    %6 = arith.select %3, %1, %5 : vector<8x256xi1>, vector<8x256xf32>
    %c0_2 = arith.constant 0 : index
    %c0_3 = arith.constant 0 : index
    %7 = vector.load %arg2[%c0_2, %c0_3] : memref<8x256xf32, #tpu.memory_space<vmem>>, vector<8x256xf32>
    tpu.vector_store %arg2[%c0_2, %c0_3], %6 {strides = array<i32>} : memref<8x256xf32, #tpu.memory_space<vmem>>, vector<8x256xf32>,
    return
  }
  func.func @transform_0(%arg0: i32) -> (i32, i32) {
    %c0_i32 = arith.constant 0 : i32
    %c0_i32_0 = arith.constant 0 : i32
    return %arg0, %c0_i32 : i32, i32
  }
  func.func @transform_1(%arg0: i32) -> (i32, i32) {
    %c0_i32 = arith.constant 0 : i32
    %c0_i32_0 = arith.constant 0 : i32
    return %arg0, %c0_i32 : i32, i32
  }
}

</mosaic_0001>

<llo_original>
// kernel: tpu_custom_call.1
$region0: #{tpu_custom_call.1}
  #allocation0 [shape = 'u32[]', space=smem, size = 0x4, offset = 0x4, fixed_abs, tag = 'smem constant byte address 0x4 - core index']
  #allocation1 [shape = 'u32[144,128]{1,0:T(1,128)}', space=vmem, size = 0x12000, scoped, tag = 'internal scratch']
  %s0 = inlined_call_operand.hbm [shape: f32[8,256], index: 0, kind: input, shape index: {}]
  %s1 = inlined_call_operand.hbm [shape: f32[8,256], index: 1, kind: output, shape index: {}]
  %s2 = sld [smem:[#allocation0]]
  $region18: #{tpu_custom_call.1} parent=0
    _
  %s4 = ssub.s32 1, %s2
  %s5 = scalar_select 0, %s4, %s2
  $region1: #{tpu_custom_call.1} parent=0
    #allocation2 [shape = 'u8[8192]{0}', space=vmem, size = 0x2000, scoped, tag = 'input window, operand 0, single buffered']
    #allocation3 [shape = 's32[1]{0}', space=sflag, size = 0x4, scoped, tag = 'scoped memory for tpu_custom_call.1']
    #allocation4 [shape = 's32[1]{0}', space=sflag, size = 0x4, scoped, tag = 'scoped memory for tpu_custom_call.1']
    #allocation5 [shape = 'u8[8192]{0}', space=vmem, size = 0x2000, scoped, tag = 'output window, operand 0, single buffered']
    %6 = vsyncpa [#allocation3], 0
    %7 = vsyncpa [#allocation4], 0
    // Predicated region
    $region2: #{tpu_custom_call.1} parent=1 // pred_check
      _
    $region3: #{tpu_custom_call.1} parent=1 // pred_check_branch
      %9 = sbr.rel (0) target = $region5
    $region4: #{tpu_custom_call.1} parent=1 // pred_region
      %s11 = ssub.s32 256, 256
      %12 = vsyncadd [#allocation3], %s11
      %s14 = sshll.u32 [#allocation2], 4
      %s15 = int_to_ptr.vmem [resolvable:$true] %s14
      %17 = dma.hbm_to_vmem [thread:$0]  %s0, 256, %s15, [#allocation3]
    $region5: #{tpu_custom_call.1} parent=1 // pred_fallthru
      _
    // Predicated region
    $region6: #{tpu_custom_call.1} parent=1 // pred_check
      _
    $region7: #{tpu_custom_call.1} parent=1 // pred_check_branch
      %19 = sbr.rel (0) target = $region9
    $region8: #{tpu_custom_call.1} parent=1 // pred_region
      %20 = dma.done [#allocation3], 256
    $region9: #{tpu_custom_call.1} parent=1 // pred_fallthru
      _
    %v21 = vld [vmem:[#allocation2] sm:$0xff]
    %v22 = vld [vmem:[#allocation2 + $0x8] sm:$0xff]
    %v23 = vtanh.pop %v21
    %v24 = vtanh.pop %v22
    %vm25 = vcmp.gt.f32.partialorder %v21, 0.0
    %vm26 = vcmp.gt.f32.partialorder %v22, 0.0
    %v27 = vmul.f32 %v23, 0.25
    %v28 = vmul.f32 %v24, 0.25
    %v29 = vsel %vm25, %v23, %v27
    %v30 = vsel %vm26, %v24, %v28
    %31 = vst [vmem:[#allocation5] sm:$0xff] %v29
    %32 = vst [vmem:[#allocation5 + $0x8] sm:$0xff] %v30
    // Predicated region
    $region10: #{tpu_custom_call.1} parent=1 // pred_check
      _
    $region11: #{tpu_custom_call.1} parent=1 // pred_check_branch
      %34 = sbr.rel (0) target = $region13
    $region12: #{tpu_custom_call.1} parent=1 // pred_region
      %s36 = ssub.s32 256, 256
      %37 = vsyncadd [#allocation4], %s36
      %s39 = sshll.u32 [#allocation5], 4
      %s40 = int_to_ptr.vmem [resolvable:$true] %s39
      %42 = dma.vmem_to_hbm [thread:$0]  %s40, 256, %s1, [#allocation4]
    $region13: #{tpu_custom_call.1} parent=1 // pred_fallthru
      _
    // Predicated region
    $region14: #{tpu_custom_call.1} parent=1 // pred_check
      _
    $region15: #{tpu_custom_call.1} parent=1 // pred_check_branch
      %44 = sbr.rel (0) target = $region17
    $region16: #{tpu_custom_call.1} parent=1 // pred_region
      %45 = dma.done [#allocation4], 256
    $region17: #{tpu_custom_call.1} parent=1 // pred_fallthru
      _
    %46 = vsyncpa [#allocation3], 1
    %47 = vsyncpa [#allocation4], 1

</llo_original>
